<compile_context>
chip_gen: v7x
topology: tpu7x:2x2x1
jax: 0.10.0
libtpu: 0.0.40
codegen_flags: <defaults>
</compile_context>

<pallas_src>
import functools

import jax
import jax.numpy as jnp
from jax.experimental import pallas as pl
from jax.experimental.pallas import tpu as pltpu


def _cdiv(a, b):
    return -(-a // b)


def _round_up(x, m):
    return _cdiv(x, m) * m


def _nssim_kernel(x_ref, y_ref, o_ref,
                  sx_ref, sy_ref, sxx_ref, syy_ref, sxy_ref,
                  *, inv_n, s_true, tile_s, mask_tail):
    """Grid = (nc_blocks, spatial_blocks); spatial axis (1) is the reduction axis."""
    k = pl.program_id(1)
    nk = pl.num_programs(1)
    n_slices = tile_s // 128

    @pl.when(k == 0)
    def _init():
        for r in (sx_ref, sy_ref, sxx_ref, syy_ref, sxy_ref):
            r[...] = jnp.zeros_like(r)

    def _accum(masked):
        # Lane-partial accumulation: fold the (tile_nc, tile_s) block into the
        # five (tile_nc, 128) accumulators with plain vreg adds; cross-lane
        # reduction is deferred to the finalize step.
        def body(j, carry):
            a0, a1, a2, a3, a4 = carry
            c0 = pl.multiple_of(j * 128, 128)
            xj = x_ref[:, pl.ds(c0, 128)].astype(jnp.float32)
            yj = y_ref[:, pl.ds(c0, 128)].astype(jnp.float32)
            if masked:
                col = (k * tile_s + c0
                       + jax.lax.broadcasted_iota(jnp.int32, xj.shape, 1))
                keep = col < s_true
                xj = jnp.where(keep, xj, 0.0)
                yj = jnp.where(keep, yj, 0.0)
            return (a0 + xj, a1 + yj,
                    a2 + xj * xj, a3 + yj * yj, a4 + xj * yj)

        carry0 = (sx_ref[...], sy_ref[...], sxx_ref[...],
                  syy_ref[...], sxy_ref[...])
        a0, a1, a2, a3, a4 = jax.lax.fori_loop(
            0, n_slices, body, carry0, unroll=min(n_slices, 8))
        sx_ref[...] = a0
        sy_ref[...] = a1
        sxx_ref[...] = a2
        syy_ref[...] = a3
        sxy_ref[...] = a4

    if mask_tail:
        # Only the last spatial step can overhang S: keep the hot path free of
        # the per-element mask and mask only that step.
        @pl.when(k < nk - 1)
        def _bulk():
            _accum(False)

        @pl.when(k == nk - 1)
        def _tail():
            _accum(True)
    else:
        _accum(False)

    @pl.when(k == nk - 1)
    def _finalize():
        sum_x = jnp.sum(sx_ref[...], axis=-1, keepdims=True)    # (tile_nc, 1)
        sum_y = jnp.sum(sy_ref[...], axis=-1, keepdims=True)
        sum_xx = jnp.sum(sxx_ref[...], axis=-1, keepdims=True)
        sum_yy = jnp.sum(syy_ref[...], axis=-1, keepdims=True)
        sum_xy = jnp.sum(sxy_ref[...], axis=-1, keepdims=True)

        m1 = sum_x * inv_n
        m2 = sum_y * inv_n
        sig1 = sum_xx * inv_n - m1 * m1
        sig2 = sum_yy * inv_n - m2 * m2
        sig12 = sum_xy * inv_n - m1 * m2

        t1 = 2.0 * m1 * m2 + 0.0001
        t2 = 2.0 * sig12 + 0.0009
        t3 = m1 * m1 + m2 * m2 + 0.0001
        t4 = sig1 + sig2 + 0.0009
        ssim = (t1 * t2) / (t3 * t4)                             # (tile_nc, 1)

        # Lane-dense output block (unmasked stores); wrapper reads lane 0.
        o_ref[...] = jnp.broadcast_to(ssim, o_ref.shape)


def nssim(X, Y, *, target_block_bytes=4 * 1024 * 1024):
    """X, Y: (N, C, H, W), any float dtype. Returns (1, 1) float32 loss."""
    N, C, H, W = X.shape
    NC, S = N * C, H * W

    # Keep native dtype; the kernel upcasts to f32 on load.
    x2d = X.reshape(NC, S)
    y2d = Y.reshape(NC, S)
    itemsize = jnp.dtype(x2d.dtype).itemsize
    sub = {1: 32, 2: 16}.get(itemsize, 8)          # sublane packing multiple

    # --- NC tile: minimal waste, and >=2 blocks when possible (v7x 2 TCs). ---
    nc_r = _round_up(NC, sub)
    n_nc_blocks = max(_cdiv(nc_r, 256), 2 if nc_r >= 2 * sub else 1)
    tile_nc = _round_up(_cdiv(nc_r, n_nc_blocks), sub)

    # --- Spatial tile: multiple of 128 lanes, ~target_block_bytes per input
    # block (double-buffered 2-input footprint <= 4x that, under the limit). --
    target_block_bytes = min(int(target_block_bytes), 8 * 1024 * 1024)
    max_s = max(128, (target_block_bytes // (tile_nc * itemsize)) // 128 * 128)
    tile_s = min(_round_up(S, 128), max_s)

    grid = (_cdiv(NC, tile_nc), _cdiv(S, tile_s))
    mask_tail = (S % tile_s) != 0                  # only last k step can overhang

    kernel = functools.partial(
        _nssim_kernel,
        inv_n=1.0 / float(S), s_true=S, tile_s=tile_s, mask_tail=mask_tail)

    cost = pl.CostEstimate(
        flops=12 * NC * S,
        transcendentals=0,
        bytes_accessed=2 * NC * S * itemsize + NC * 128 * 4)

    ssim_rows = pl.pallas_call(
        kernel,
        out_shape=jax.ShapeDtypeStruct((NC, 128), jnp.float32),
        grid=grid,
        in_specs=[
            pl.BlockSpec((tile_nc, tile_s), lambda i, k: (i, k)),
            pl.BlockSpec((tile_nc, tile_s), lambda i, k: (i, k)),
        ],
        # Same output block across the reduction axis -> accumulator-resident.
        out_specs=pl.BlockSpec((tile_nc, 128), lambda i, k: (i, 0)),
        scratch_shapes=[pltpu.VMEM((tile_nc, 128), jnp.float32)
                        for _ in range(5)],
        compiler_params=pltpu.CompilerParams(
            dimension_semantics=("parallel", "arbitrary"),
            vmem_limit_bytes=48 * 1024 * 1024,
        ),
        cost_estimate=cost,
    )(x2d, y2d)

    # Tiny final reduction in the wrapper (matches torch: mean over C, then N).
    ssim = ssim_rows[:, 0].reshape(N, C)
    temp = jnp.mean(ssim, axis=1)                  # (N,)
    loss = jnp.mean(1.0 - temp, axis=0)            # ()
    return loss.reshape(1, 1)


def _nssim_ref(X, Y):
    # Pure-JAX reference mirroring the PyTorch module exactly.
    m1 = jnp.mean(X, axis=(2, 3), keepdims=True)
    m2 = jnp.mean(Y, axis=(2, 3), keepdims=True)
    sig1 = jnp.mean((X - m1) ** 2, axis=(2, 3), keepdims=True)
    sig2 = jnp.mean((Y - m2) ** 2, axis=(2, 3), keepdims=True)
    sig12 = jnp.mean((X - m1) * (Y - m2), axis=(2, 3), keepdims=True)
    t1 = 2 * m1 * m2 + 0.0001
    t2 = 2 * sig12 + 0.0009
    t3 = m1 ** 2 + m2 ** 2 + 0.0001
    t4 = sig1 + sig2 + 0.0009
    ssim = (t1 * t2) / (t3 * t4)
    temp = jnp.mean(ssim, axis=1)
    return jnp.mean(1.0 - temp, axis=0)            # (1, 1)


if __name__ == "__main__":
    key = jax.random.PRNGKey(0)

    # (shape, dtype, target_block_bytes): covers aligned single-step,
    # NC/spatial-tail masking, multi-step accumulation, multi-step + masked
    # tail, and narrow-dtype input paths.
    cases = [
        ((2, 4, 16, 16), jnp.float32, 4 * 1024 * 1024),   # aligned, 1 spatial step
        ((2, 3, 20, 20), jnp.float32, 4 * 1024 * 1024),   # NC + spatial tails
        ((2, 4, 32, 32), jnp.float32, 8 * 1024),          # 4 spatial steps, no mask
        ((1, 3, 20, 20), jnp.float32, 4 * 1024),          # 4 steps + masked tail
        ((2, 4, 16, 16), jnp.bfloat16, 4 * 1024 * 1024),  # native narrow dtype
    ]

    for shape, dtype, tgt in cases:
        key, kx, ky = jax.random.split(key, 3)
        X = jax.random.uniform(kx, shape, dtype=jnp.float32).astype(dtype)
        Y = jax.random.uniform(ky, shape, dtype=jnp.float32).astype(dtype)

        loss = nssim(X, Y, target_block_bytes=tgt)
        jax.block_until_ready(loss)

        ref = _nssim_ref(X.astype(jnp.float32), Y.astype(jnp.float32))
        assert loss.shape == (1, 1), loss.shape
        assert jnp.allclose(loss, ref, rtol=1e-4, atol=2e-5), (shape, loss, ref)

    print("KERNEL_OK")
</pallas_src>

<mosaic_0001>
module attributes {stable_mosaic.version = 11 : i64} {
  func.func @_nssim_kernel(%arg0: i32, %arg1: i32, %arg2: memref<8x256xf32, #tpu.memory_space<vmem>>, %arg3: memref<8x256xf32, #tpu.memory_space<vmem>>, %arg4: memref<8x128xf32, #tpu.memory_space<vmem>>, %arg5: memref<8x128xf32, #tpu.memory_space<vmem>>, %arg6: memref<8x128xf32, #tpu.memory_space<vmem>>, %arg7: memref<8x128xf32, #tpu.memory_space<vmem>>, %arg8: memref<8x128xf32, #tpu.memory_space<vmem>>, %arg9: memref<8x128xf32, #tpu.memory_space<vmem>>) attributes {dimension_semantics = [#tpu.dimension_semantics<parallel>, #tpu.dimension_semantics<arbitrary>], iteration_bounds = array<i64: 1, 1>, scalar_prefetch = 0 : i64, scratch_operands = 5 : i64, tpu.core_type = #tpu.core_type<tc>, window_params = [{transform_indices = @transform_0, window_bounds = array<i64: 8, 256>}, {transform_indices = @transform_1, window_bounds = array<i64: 8, 256>}, {transform_indices = @transform_2, window_bounds = array<i64: 8, 128>}]} {
    %c0_i32 = arith.constant 0 : i32
    %0 = arith.cmpi eq, %arg1, %c0_i32 : i32
    %1 = arith.extui %0 : i1 to i32
    %c0_i32_0 = arith.constant 0 : i32
    %2 = arith.cmpi ne, %1, %c0_i32_0 : i32
    scf.if %2 {
      %cst = arith.constant 0.000000e+00 : f32
      %44 = vector.broadcast %cst : f32 to vector<8x128xf32>
      %c0_28 = arith.constant 0 : index
      %c0_29 = arith.constant 0 : index
      %45 = vector.load %arg5[%c0_28, %c0_29] : memref<8x128xf32, #tpu.memory_space<vmem>>, vector<8x128xf32>
      tpu.vector_store %arg5[%c0_28, %c0_29], %44 {strides = array<i32>} : memref<8x128xf32, #tpu.memory_space<vmem>>, vector<8x128xf32>,
      %cst_30 = arith.constant 0.000000e+00 : f32
      %46 = vector.broadcast %cst_30 : f32 to vector<8x128xf32>
      %c0_31 = arith.constant 0 : index
      %c0_32 = arith.constant 0 : index
      %47 = vector.load %arg6[%c0_31, %c0_32] : memref<8x128xf32, #tpu.memory_space<vmem>>, vector<8x128xf32>
      tpu.vector_store %arg6[%c0_31, %c0_32], %46 {strides = array<i32>} : memref<8x128xf32, #tpu.memory_space<vmem>>, vector<8x128xf32>,
      %cst_33 = arith.constant 0.000000e+00 : f32
      %48 = vector.broadcast %cst_33 : f32 to vector<8x128xf32>
      %c0_34 = arith.constant 0 : index
      %c0_35 = arith.constant 0 : index
      %49 = vector.load %arg7[%c0_34, %c0_35] : memref<8x128xf32, #tpu.memory_space<vmem>>, vector<8x128xf32>
      tpu.vector_store %arg7[%c0_34, %c0_35], %48 {strides = array<i32>} : memref<8x128xf32, #tpu.memory_space<vmem>>, vector<8x128xf32>,
      %cst_36 = arith.constant 0.000000e+00 : f32
      %50 = vector.broadcast %cst_36 : f32 to vector<8x128xf32>
      %c0_37 = arith.constant 0 : index
      %c0_38 = arith.constant 0 : index
      %51 = vector.load %arg8[%c0_37, %c0_38] : memref<8x128xf32, #tpu.memory_space<vmem>>, vector<8x128xf32>
      tpu.vector_store %arg8[%c0_37, %c0_38], %50 {strides = array<i32>} : memref<8x128xf32, #tpu.memory_space<vmem>>, vector<8x128xf32>,
      %cst_39 = arith.constant 0.000000e+00 : f32
      %52 = vector.broadcast %cst_39 : f32 to vector<8x128xf32>
      %c0_40 = arith.constant 0 : index
      %c0_41 = arith.constant 0 : index
      %53 = vector.load %arg9[%c0_40, %c0_41] : memref<8x128xf32, #tpu.memory_space<vmem>>, vector<8x128xf32>
      tpu.vector_store %arg9[%c0_40, %c0_41], %52 {strides = array<i32>} : memref<8x128xf32, #tpu.memory_space<vmem>>, vector<8x128xf32>,
    } else {
    }
    %c0 = arith.constant 0 : index
    %c0_1 = arith.constant 0 : index
    %3 = vector.load %arg5[%c0, %c0_1] : memref<8x128xf32, #tpu.memory_space<vmem>>, vector<8x128xf32>
    %c0_2 = arith.constant 0 : index
    %c0_3 = arith.constant 0 : index
    %4 = vector.load %arg6[%c0_2, %c0_3] : memref<8x128xf32, #tpu.memory_space<vmem>>, vector<8x128xf32>
    %c0_4 = arith.constant 0 : index
    %c0_5 = arith.constant 0 : index
    %5 = vector.load %arg7[%c0_4, %c0_5] : memref<8x128xf32, #tpu.memory_space<vmem>>, vector<8x128xf32>
    %c0_6 = arith.constant 0 : index
    %c0_7 = arith.constant 0 : index
    %6 = vector.load %arg8[%c0_6, %c0_7] : memref<8x128xf32, #tpu.memory_space<vmem>>, vector<8x128xf32>
    %c0_8 = arith.constant 0 : index
    %c0_9 = arith.constant 0 : index
    %7 = vector.load %arg9[%c0_8, %c0_9] : memref<8x128xf32, #tpu.memory_space<vmem>>, vector<8x128xf32>
    %c0_i32_10 = arith.constant 0 : i32
    %c128_i32 = arith.constant 128 : i32
    %8 = arith.muli %c0_i32_10, %c128_i32 : i32
    %9 = tpu.assume_multiple %8, 128 : i32
    %c0_11 = arith.constant 0 : index
    %10 = arith.index_cast %9 : i32 to index
    %11 = vector.load %arg2[%c0_11, %10] : memref<8x256xf32, #tpu.memory_space<vmem>>, vector<8x128xf32>
    %c0_12 = arith.constant 0 : index
    %12 = arith.index_cast %9 : i32 to index
    %13 = vector.load %arg3[%c0_12, %12] : memref<8x256xf32, #tpu.memory_space<vmem>>, vector<8x128xf32>
    %14 = arith.addf %3, %11 : vector<8x128xf32>
    %15 = arith.addf %4, %13 : vector<8x128xf32>
    %16 = arith.mulf %11, %11 : vector<8x128xf32>
    %17 = arith.addf %5, %16 : vector<8x128xf32>
    %18 = arith.mulf %13, %13 : vector<8x128xf32>
    %19 = arith.addf %6, %18 : vector<8x128xf32>
    %20 = arith.mulf %11, %13 : vector<8x128xf32>
    %21 = arith.addf %7, %20 : vector<8x128xf32>
    %c1_i32 = arith.constant 1 : i32
    %c128_i32_13 = arith.constant 128 : i32
    %22 = arith.muli %c1_i32, %c128_i32_13 : i32
    %23 = tpu.assume_multiple %22, 128 : i32
    %c0_14 = arith.constant 0 : index
    %24 = arith.index_cast %23 : i32 to index
    %25 = vector.load %arg2[%c0_14, %24] : memref<8x256xf32, #tpu.memory_space<vmem>>, vector<8x128xf32>
    %c0_15 = arith.constant 0 : index
    %26 = arith.index_cast %23 : i32 to index
    %27 = vector.load %arg3[%c0_15, %26] : memref<8x256xf32, #tpu.memory_space<vmem>>, vector<8x128xf32>
    %28 = arith.addf %14, %25 : vector<8x128xf32>
    %29 = arith.addf %15, %27 : vector<8x128xf32>
    %30 = arith.mulf %25, %25 : vector<8x128xf32>
    %31 = arith.addf %17, %30 : vector<8x128xf32>
    %32 = arith.mulf %27, %27 : vector<8x128xf32>
    %33 = arith.addf %19, %32 : vector<8x128xf32>
    %34 = arith.mulf %25, %27 : vector<8x128xf32>
    %35 = arith.addf %21, %34 : vector<8x128xf32>
    %c2_i32 = arith.constant 2 : i32
    %c0_16 = arith.constant 0 : index
    %c0_17 = arith.constant 0 : index
    %36 = vector.load %arg5[%c0_16, %c0_17] : memref<8x128xf32, #tpu.memory_space<vmem>>, vector<8x128xf32>
    tpu.vector_store %arg5[%c0_16, %c0_17], %28 {strides = array<i32>} : memref<8x128xf32, #tpu.memory_space<vmem>>, vector<8x128xf32>,
    %c0_18 = arith.constant 0 : index
    %c0_19 = arith.constant 0 : index
    %37 = vector.load %arg6[%c0_18, %c0_19] : memref<8x128xf32, #tpu.memory_space<vmem>>, vector<8x128xf32>
    tpu.vector_store %arg6[%c0_18, %c0_19], %29 {strides = array<i32>} : memref<8x128xf32, #tpu.memory_space<vmem>>, vector<8x128xf32>,
    %c0_20 = arith.constant 0 : index
    %c0_21 = arith.constant 0 : index
    %38 = vector.load %arg7[%c0_20, %c0_21] : memref<8x128xf32, #tpu.memory_space<vmem>>, vector<8x128xf32>
    tpu.vector_store %arg7[%c0_20, %c0_21], %31 {strides = array<i32>} : memref<8x128xf32, #tpu.memory_space<vmem>>, vector<8x128xf32>,
    %c0_22 = arith.constant 0 : index
    %c0_23 = arith.constant 0 : index
    %39 = vector.load %arg8[%c0_22, %c0_23] : memref<8x128xf32, #tpu.memory_space<vmem>>, vector<8x128xf32>
    tpu.vector_store %arg8[%c0_22, %c0_23], %33 {strides = array<i32>} : memref<8x128xf32, #tpu.memory_space<vmem>>, vector<8x128xf32>,
    %c0_24 = arith.constant 0 : index
    %c0_25 = arith.constant 0 : index
    %40 = vector.load %arg9[%c0_24, %c0_25] : memref<8x128xf32, #tpu.memory_space<vmem>>, vector<8x128xf32>
    tpu.vector_store %arg9[%c0_24, %c0_25], %35 {strides = array<i32>} : memref<8x128xf32, #tpu.memory_space<vmem>>, vector<8x128xf32>,
    %c0_i32_26 = arith.constant 0 : i32
    %41 = arith.cmpi eq, %arg1, %c0_i32_26 : i32
    %42 = arith.extui %41 : i1 to i32
    %c0_i32_27 = arith.constant 0 : i32
    %43 = arith.cmpi ne, %42, %c0_i32_27 : i32
    scf.if %43 {
      %c0_28 = arith.constant 0 : index
      %c0_29 = arith.constant 0 : index
      %44 = vector.load %arg5[%c0_28, %c0_29] : memref<8x128xf32, #tpu.memory_space<vmem>>, vector<8x128xf32>
      %cst = arith.constant dense<0.000000e+00> : vector<8xf32>
      %45 = vector.multi_reduction <add>, %44, %cst [1] : vector<8x128xf32> to vector<8xf32>
      %46 = vector.shape_cast %45 : vector<8xf32> to vector<8x1xf32>
      %c0_30 = arith.constant 0 : index
      %c0_31 = arith.constant 0 : index
      %47 = vector.load %arg6[%c0_30, %c0_31] : memref<8x128xf32, #tpu.memory_space<vmem>>, vector<8x128xf32>
      %cst_32 = arith.constant dense<0.000000e+00> : vector<8xf32>
      %48 = vector.multi_reduction <add>, %47, %cst_32 [1] : vector<8x128xf32> to vector<8xf32>
      %49 = vector.shape_cast %48 : vector<8xf32> to vector<8x1xf32>
      %c0_33 = arith.constant 0 : index
      %c0_34 = arith.constant 0 : index
      %50 = vector.load %arg7[%c0_33, %c0_34] : memref<8x128xf32, #tpu.memory_space<vmem>>, vector<8x128xf32>
      %cst_35 = arith.constant dense<0.000000e+00> : vector<8xf32>
      %51 = vector.multi_reduction <add>, %50, %cst_35 [1] : vector<8x128xf32> to vector<8xf32>
      %52 = vector.shape_cast %51 : vector<8xf32> to vector<8x1xf32>
      %c0_36 = arith.constant 0 : index
      %c0_37 = arith.constant 0 : index
      %53 = vector.load %arg8[%c0_36, %c0_37] : memref<8x128xf32, #tpu.memory_space<vmem>>, vector<8x128xf32>
      %cst_38 = arith.constant dense<0.000000e+00> : vector<8xf32>
      %54 = vector.multi_reduction <add>, %53, %cst_38 [1] : vector<8x128xf32> to vector<8xf32>
      %55 = vector.shape_cast %54 : vector<8xf32> to vector<8x1xf32>
      %c0_39 = arith.constant 0 : index
      %c0_40 = arith.constant 0 : index
      %56 = vector.load %arg9[%c0_39, %c0_40] : memref<8x128xf32, #tpu.memory_space<vmem>>, vector<8x128xf32>
      %cst_41 = arith.constant dense<0.000000e+00> : vector<8xf32>
      %57 = vector.multi_reduction <add>, %56, %cst_41 [1] : vector<8x128xf32> to vector<8xf32>
      %58 = vector.shape_cast %57 : vector<8xf32> to vector<8x1xf32>
      %cst_42 = arith.constant 3.906250e-03 : f32
      %59 = vector.broadcast %cst_42 : f32 to vector<8x1xf32>
      %60 = arith.mulf %46, %59 : vector<8x1xf32>
      %cst_43 = arith.constant 3.906250e-03 : f32
      %61 = vector.broadcast %cst_43 : f32 to vector<8x1xf32>
      %62 = arith.mulf %49, %61 : vector<8x1xf32>
      %cst_44 = arith.constant 3.906250e-03 : f32
      %63 = vector.broadcast %cst_44 : f32 to vector<8x1xf32>
      %64 = arith.mulf %52, %63 : vector<8x1xf32>
      %65 = arith.mulf %60, %60 : vector<8x1xf32>
      %66 = arith.subf %64, %65 : vector<8x1xf32>
      %cst_45 = arith.constant 3.906250e-03 : f32
      %67 = vector.broadcast %cst_45 : f32 to vector<8x1xf32>
      %68 = arith.mulf %55, %67 : vector<8x1xf32>
      %69 = arith.mulf %62, %62 : vector<8x1xf32>
      %70 = arith.subf %68, %69 : vector<8x1xf32>
      %cst_46 = arith.constant 3.906250e-03 : f32
      %71 = vector.broadcast %cst_46 : f32 to vector<8x1xf32>
      %72 = arith.mulf %58, %71 : vector<8x1xf32>
      %73 = arith.mulf %60, %62 : vector<8x1xf32>
      %74 = arith.subf %72, %73 : vector<8x1xf32>
      %cst_47 = arith.constant 2.000000e+00 : f32
      %75 = vector.broadcast %cst_47 : f32 to vector<8x1xf32>
      %76 = arith.mulf %75, %60 : vector<8x1xf32>
      %77 = arith.mulf %76, %62 : vector<8x1xf32>
      %cst_48 = arith.constant 9.99999974E-5 : f32
      %78 = vector.broadcast %cst_48 : f32 to vector<8x1xf32>
      %79 = arith.addf %77, %78 : vector<8x1xf32>
      %cst_49 = arith.constant 2.000000e+00 : f32
      %80 = vector.broadcast %cst_49 : f32 to vector<8x1xf32>
      %81 = arith.mulf %80, %74 : vector<8x1xf32>
      %cst_50 = arith.constant 8.99999984E-4 : f32
      %82 = vector.broadcast %cst_50 : f32 to vector<8x1xf32>
      %83 = arith.addf %81, %82 : vector<8x1xf32>
      %84 = arith.mulf %60, %60 : vector<8x1xf32>
      %85 = arith.mulf %62, %62 : vector<8x1xf32>
      %86 = arith.addf %84, %85 : vector<8x1xf32>
      %cst_51 = arith.constant 9.99999974E-5 : f32
      %87 = vector.broadcast %cst_51 : f32 to vector<8x1xf32>
      %88 = arith.addf %86, %87 : vector<8x1xf32>
      %89 = arith.addf %66, %70 : vector<8x1xf32>
      %cst_52 = arith.constant 8.99999984E-4 : f32
      %90 = vector.broadcast %cst_52 : f32 to vector<8x1xf32>
      %91 = arith.addf %89, %90 : vector<8x1xf32>
      %92 = arith.mulf %79, %83 : vector<8x1xf32>
      %93 = arith.mulf %88, %91 : vector<8x1xf32>
      %94 = arith.divf %92, %93 : vector<8x1xf32>
      %95 = vector.shape_cast %94 : vector<8x1xf32> to vector<8x1xf32>
      %96 = vector.broadcast %95 : vector<8x1xf32> to vector<8x128xf32>
      %c0_53 = arith.constant 0 : index
      %c0_54 = arith.constant 0 : index
      %97 = vector.load %arg4[%c0_53, %c0_54] : memref<8x128xf32, #tpu.memory_space<vmem>>, vector<8x128xf32>
      tpu.vector_store %arg4[%c0_53, %c0_54], %96 {strides = array<i32>} : memref<8x128xf32, #tpu.memory_space<vmem>>, vector<8x128xf32>,
    } else {
    }
    return
  }
  func.func @transform_0(%arg0: i32, %arg1: i32) -> (i32, i32) {
    %c0_i32 = arith.constant 0 : i32
    return %arg0, %arg1 : i32, i32
  }
  func.func @transform_1(%arg0: i32, %arg1: i32) -> (i32, i32) {
    %c0_i32 = arith.constant 0 : i32
    return %arg0, %arg1 : i32, i32
  }
  func.func @transform_2(%arg0: i32, %arg1: i32) -> (i32, i32) {
    %c0_i32 = arith.constant 0 : i32
    %c0_i32_0 = arith.constant 0 : i32
    return %arg0, %c0_i32 : i32, i32
  }
}

</mosaic_0001>

<llo_original>
// kernel: tpu_custom_call.1
$region0: #{tpu_custom_call.1}
  #allocation0 [shape = 'u32[]', space=smem, size = 0x4, offset = 0x4, fixed_abs, tag = 'smem constant byte address 0x4 - core index']
  #allocation1 [shape = 'u32[144,128]{1,0:T(1,128)}', space=vmem, size = 0x12000, scoped, tag = 'internal scratch']
  #allocation2 [shape = 'f32[8,128]{1,0:T(8,128)}', space=vmem, size = 0x1000, scoped, tag = 'scratch operand']
  #allocation3 [shape = 'f32[8,128]{1,0:T(8,128)}', space=vmem, size = 0x1000, scoped, tag = 'scratch operand']
  #allocation4 [shape = 'f32[8,128]{1,0:T(8,128)}', space=vmem, size = 0x1000, scoped, tag = 'scratch operand']
  #allocation5 [shape = 'f32[8,128]{1,0:T(8,128)}', space=vmem, size = 0x1000, scoped, tag = 'scratch operand']
  #allocation6 [shape = 'f32[8,128]{1,0:T(8,128)}', space=vmem, size = 0x1000, scoped, tag = 'scratch operand']
  %s0 = inlined_call_operand.hbm [shape: f32[8,256], index: 0, kind: input, shape index: {}]
  %s1 = inlined_call_operand.hbm [shape: f32[8,256], index: 1, kind: input, shape index: {}]
  %s2 = inlined_call_operand.hbm [shape: f32[8,128], index: 2, kind: output, shape index: {}]
  %s3 = sld [smem:[#allocation0]]
  $region34: #{tpu_custom_call.1} parent=0
    _
  %s5 = ssub.s32 1, %s3
  %s6 = scalar_select 0, %s5, %s3
  $region1: #{tpu_custom_call.1} parent=0
    #allocation7 [shape = 'u8[8192]{0}', space=vmem, size = 0x2000, scoped, tag = 'input window, operand 0, single buffered']
    #allocation8 [shape = 's32[1]{0}', space=sflag, size = 0x4, scoped, tag = 'scoped memory for tpu_custom_call.1']
    #allocation9 [shape = 's32[1]{0}', space=sflag, size = 0x4, scoped, tag = 'scoped memory for tpu_custom_call.1']
    #allocation10 [shape = 'u8[8192]{0}', space=vmem, size = 0x2000, scoped, tag = 'input window, operand 1, single buffered']
    #allocation11 [shape = 's32[1]{0}', space=sflag, size = 0x4, scoped, tag = 'scoped memory for tpu_custom_call.1']
    #allocation12 [shape = 'u8[4096]{0}', space=vmem, size = 0x1000, scoped, tag = 'output window, operand 0, single buffered']
    %7 = vsyncpa [#allocation8], 0
    %8 = vsyncpa [#allocation11], 0
    %9 = vsyncpa [#allocation9], 0
    // Predicated region
    $region2: #{tpu_custom_call.1} parent=1 // pred_check
      _
    $region3: #{tpu_custom_call.1} parent=1 // pred_check_branch
      %11 = sbr.rel (0) target = $region5
    $region4: #{tpu_custom_call.1} parent=1 // pred_region
      %s13 = ssub.s32 256, 256
      %14 = vsyncadd [#allocation8], %s13
      %s16 = sshll.u32 [#allocation7], 4
      %s17 = int_to_ptr.vmem [resolvable:$true] %s16
      %19 = dma.hbm_to_vmem [thread:$0]  %s0, 256, %s17, [#allocation8]
    $region5: #{tpu_custom_call.1} parent=1 // pred_fallthru
      _
    // Predicated region
    $region6: #{tpu_custom_call.1} parent=1 // pred_check
      _
    $region7: #{tpu_custom_call.1} parent=1 // pred_check_branch
      %21 = sbr.rel (0) target = $region9
    $region8: #{tpu_custom_call.1} parent=1 // pred_region
      %s23 = ssub.s32 256, 256
      %24 = vsyncadd [#allocation11], %s23
      %s26 = sshll.u32 [#allocation10], 4
      %s27 = int_to_ptr.vmem [resolvable:$true] %s26
      %29 = dma.hbm_to_vmem [thread:$0]  %s1, 256, %s27, [#allocation11]
    $region9: #{tpu_custom_call.1} parent=1 // pred_fallthru
      _
    // Predicated region
    $region10: #{tpu_custom_call.1} parent=1 // pred_check
      _
    $region11: #{tpu_custom_call.1} parent=1 // pred_check_branch
      %31 = sbr.rel (0) target = $region13
    $region12: #{tpu_custom_call.1} parent=1 // pred_region
      %32 = dma.done [#allocation8], 256
    $region13: #{tpu_custom_call.1} parent=1 // pred_fallthru
      _
    // Predicated region
    $region14: #{tpu_custom_call.1} parent=1 // pred_check
      _
    $region15: #{tpu_custom_call.1} parent=1 // pred_check_branch
      %34 = sbr.rel (0) target = $region17
    $region16: #{tpu_custom_call.1} parent=1 // pred_region
      %35 = dma.done [#allocation11], 256
    $region17: #{tpu_custom_call.1} parent=1 // pred_fallthru
      _
    %p36 = scmp.eq.s32.totalorder 0, 0
    // Predicated region
    $region18: #{tpu_custom_call.1} parent=1 // pred_check
      %p37 = pneg %p36
    $region19: #{tpu_custom_call.1} parent=1 // pred_check_branch
      %39 = sbr.rel (%p37) target = $region21
    $region20: #{tpu_custom_call.1} parent=1 // pred_region
      %40 = vst [vmem:[#allocation2] sm:$0xff] 0.0
      %41 = vst [vmem:[#allocation3] sm:$0xff] 0.0
      %42 = vst [vmem:[#allocation4] sm:$0xff] 0.0
      %43 = vst [vmem:[#allocation5] sm:$0xff] 0.0
      %44 = vst [vmem:[#allocation6] sm:$0xff] 0.0
    $region21: #{tpu_custom_call.1} parent=1 // pred_fallthru
      _
    %v45 = vld [vmem:[#allocation2] sm:$0xff]
    %v46 = vld [vmem:[#allocation3] sm:$0xff]
    %v47 = vld [vmem:[#allocation4] sm:$0xff]
    %v48 = vld [vmem:[#allocation5] sm:$0xff]
    %v49 = vld [vmem:[#allocation6] sm:$0xff]
    %v50 = vld [vmem:[#allocation7] sm:$0xff]
    %v51 = vld [vmem:[#allocation10] sm:$0xff]
    %v52 = vadd.f32 %v45, %v50
    %v53 = vadd.f32 %v46, %v51
    %v54 = vmul.f32 %v50, %v50
    %v55 = vadd.f32 %v47, %v54
    %v56 = vmul.f32 %v51, %v51
    %v57 = vadd.f32 %v48, %v56
    %v58 = vmul.f32 %v50, %v51
    %v59 = vadd.f32 %v49, %v58
    %s60 = scalar_lea.vmem [#allocation7], 8
    %v61 = vld [vmem:[%s60] sm:$0xff]
    %s62 = scalar_lea.vmem [#allocation10], 8
    %v63 = vld [vmem:[%s62] sm:$0xff]
    %v64 = vadd.f32 %v52, %v61
    %v65 = vadd.f32 %v53, %v63
    %v66 = vmul.f32 %v61, %v61
    %v67 = vadd.f32 %v55, %v66
    %v68 = vmul.f32 %v63, %v63
    %v69 = vadd.f32 %v57, %v68
    %v70 = vmul.f32 %v61, %v63
    %v71 = vadd.f32 %v59, %v70
    %72 = vst [vmem:[#allocation2] sm:$0xff] %v64
    %73 = vst [vmem:[#allocation3] sm:$0xff] %v65
    %74 = vst [vmem:[#allocation4] sm:$0xff] %v67
    %75 = vst [vmem:[#allocation5] sm:$0xff] %v69
    %76 = vst [vmem:[#allocation6] sm:$0xff] %v71
    // Predicated region
    $region22: #{tpu_custom_call.1} parent=1 // pred_check
      %p77 = pneg %p36
    $region23: #{tpu_custom_call.1} parent=1 // pred_check_branch
      %79 = sbr.rel (%p77) target = $region25
    $region24: #{tpu_custom_call.1} parent=1 // pred_region
      %v80 = vld [vmem:[#allocation2] sm:$0xff]
      %81 = vadd.xlane.f32.xlu0 %v80
      %v82 = vpop.xlane.xlu0 %81
      %v83 = vld [vmem:[#allocation3] sm:$0xff]
      %84 = vadd.xlane.f32.xlu0 %v83
      %v85 = vpop.xlane.xlu0 %84
      %v86 = vld [vmem:[#allocation4] sm:$0xff]
      %87 = vadd.xlane.f32.xlu0 %v86
      %v88 = vpop.xlane.xlu0 %87
      %v89 = vld [vmem:[#allocation5] sm:$0xff]
      %90 = vadd.xlane.f32.xlu0 %v89
      %v91 = vpop.xlane.xlu0 %90
      %v92 = vld [vmem:[#allocation6] sm:$0xff]
      %93 = vadd.xlane.f32.xlu0 %v92
      %v94 = vpop.xlane.xlu0 %93
      %v95 = vmul.f32 %v82, 0.00390625
      %v96 = vmul.f32 %v85, 0.00390625
      %v97 = vmul.f32 %v88, 0.00390625
      %v98 = vmul.f32 %v95, %v95
      %v99 = vsub.f32 %v97, %v98
      %v100 = vmul.f32 %v91, 0.00390625
      %v101 = vmul.f32 %v96, %v96
      %v102 = vsub.f32 %v100, %v101
      %v103 = vmul.f32 %v94, 0.00390625
      %v104 = vmul.f32 %v95, %v96
      %v105 = vsub.f32 %v103, %v104
      %v106 = vmul.f32 %v95, 2.0
      %v107 = vmul.f32 %v106, %v96
      %v108 = vadd.f32 %v107, 0.0001
      %v109 = vmul.f32 %v105, 2.0
      %v110 = vadd.f32 %v109, 0.0009
      %v111 = vadd.f32 %v98, %v101
      %v112 = vadd.f32 %v111, 0.0001
      %v113 = vadd.f32 %v99, %v102
      %v114 = vadd.f32 %v113, 0.0009
      %v115 = vmul.f32 %v108, %v110
      %v116 = vmul.f32 %v112, %v114
      %v117 = vrcp.pop %v116
      %v118 = vmul.f32 %v115, %v117
      %119 = vst [vmem:[#allocation12] sm:$0xff] %v118
    $region25: #{tpu_custom_call.1} parent=1 // pred_fallthru
      _
    // Predicated region
    $region26: #{tpu_custom_call.1} parent=1 // pred_check
      _
    $region27: #{tpu_custom_call.1} parent=1 // pred_check_branch
      %121 = sbr.rel (0) target = $region29
    $region28: #{tpu_custom_call.1} parent=1 // pred_region
      %s123 = ssub.s32 128, 128
      %124 = vsyncadd [#allocation9], %s123
      %s126 = sshll.u32 [#allocation12], 4
      %s127 = int_to_ptr.vmem [resolvable:$true] %s126
      %129 = dma.vmem_to_hbm [thread:$0]  %s127, 128, %s2, [#allocation9]
    $region29: #{tpu_custom_call.1} parent=1 // pred_fallthru
      _
    // Predicated region
    $region30: #{tpu_custom_call.1} parent=1 // pred_check
      _
    $region31: #{tpu_custom_call.1} parent=1 // pred_check_branch
      %131 = sbr.rel (0) target = $region33
    $region32: #{tpu_custom_call.1} parent=1 // pred_region
      %132 = dma.done [#allocation9], 128
    $region33: #{tpu_custom_call.1} parent=1 // pred_fallthru
      _
    %133 = vsyncpa [#allocation8], 1
    %134 = vsyncpa [#allocation11], 1
    %135 = vsyncpa [#allocation9], 1

</llo_original>
